<compile_context>
chip_gen: v7x
topology: tpu7x:2x2x1
jax: 0.10.0
libtpu: 0.0.40
codegen_flags: <defaults>
</compile_context>

<pallas_src>
import functools

import jax
import jax.numpy as jnp
from jax.experimental import pallas as pl
from jax.experimental.pallas import tpu as pltpu


# --------------------------------------------------------------------------- #
# helpers
# --------------------------------------------------------------------------- #
def _round_up(x: int, m: int) -> int:
    return ((x + m - 1) // m) * m


def _cdiv(a: int, b: int) -> int:
    return -(-a // b)


def _vmem_capacity_bytes() -> int:
    try:
        info = pltpu.get_tpu_info()
        cap = getattr(info, "vmem_capacity_bytes", None)
        if cap:
            return int(cap)
    except Exception:
        pass
    return 64 << 20  # safe on every generation (v7x has 64 MiB per TC)


def _default_num_bank_shards() -> int:
    # v7x has 2 TensorCores per chip -> shard the bank (reduction) axis, not
    # the query axis, so total bank HBM reads stay 1x.
    try:
        kind = jax.devices()[0].device_kind.lower()
        if "v7" in kind or "7x" in kind:
            return 2
    except Exception:
        pass
    return 1


# --------------------------------------------------------------------------- #
# kernel
# --------------------------------------------------------------------------- #
def _nn_argmax_kernel(xn_ref, bank_ref, aux_ref, vals_ref, idx_ref,
                      maxv_sc, bidx_sc, *, compute_dtype, cols_per_shard):
    """Grid = (bank shard [parallel], query block [parallel], bank slab [red]).

    xn_ref   : (TN, D)  pre-normalized query block, compute dtype (resident)
    bank_ref : (TK, D)  raw bank slab
    aux_ref  : (2, TK)  f32: row 0 = 1/||bank row||, row 1 = 0 or -1e30 pad bias
    vals_ref : (1, TN, 1) f32   per-shard best similarity
    idx_ref  : (1, TN, 1) int32 per-shard best global index
    maxv_sc / bidx_sc : (TN, 1) running best value / index
    """
    k = pl.program_id(2)

    @pl.when(k == 0)
    def _():
        maxv_sc[...] = jnp.full(maxv_sc.shape, -jnp.inf, maxv_sc.dtype)
        bidx_sc[...] = jnp.zeros(bidx_sc.shape, bidx_sc.dtype)

    xq = xn_ref[...]
    if xq.dtype != compute_dtype:
        xq = xq.astype(compute_dtype)
    bk = bank_ref[...]
    if bk.dtype != compute_dtype:
        bk = bk.astype(compute_dtype)

    # similarity tile: einsum('nd,md->nm'), f32 accumulation on the MXU.
    sim = jax.lax.dot_general(
        xq, bk, (((1,), (1,)), ((), ())),
        preferred_element_type=jnp.float32)                  # (TN, TK)

    inv_norm = aux_ref[0:1, :]                               # (1, TK)
    bias = aux_ref[1:2, :]                                   # (1, TK)
    sim = sim * inv_norm + bias                              # normalize + pad-mask

    tile_max = jnp.max(sim, axis=1, keepdims=True)           # (TN, 1)

    # first index achieving the tile max (first-index tie-break, like argmax)
    tk = sim.shape[1]
    iota = jax.lax.broadcasted_iota(jnp.int32, sim.shape, 1)
    first_idx = jnp.min(jnp.where(sim >= tile_max, iota, tk),
                        axis=1, keepdims=True)               # (TN, 1)

    base = pl.program_id(0) * cols_per_shard + k * tk
    global_idx = first_idx + base

    # keep the earlier tile on exact ties (strict >) -> global first-argmax
    better = tile_max > maxv_sc[...]
    maxv_sc[...] = jnp.where(better, tile_max, maxv_sc[...])
    bidx_sc[...] = jnp.where(better, global_idx, bidx_sc[...])

    @pl.when(k == pl.num_programs(2) - 1)
    def _():
        vals_ref[...] = maxv_sc[...][None]
        idx_ref[...] = bidx_sc[...][None]


# --------------------------------------------------------------------------- #
# wrapper
# --------------------------------------------------------------------------- #
def nearest_neighbour_indices_pallas(output: jnp.ndarray,
                                     bank: jnp.ndarray,
                                     inv_norm: jnp.ndarray | None = None,
                                     *,
                                     compute_dtype=None,
                                     max_slab_bytes: int = 2 << 20,
                                     num_bank_shards: int | None = None,
                                     max_query_rows: int | None = None
                                     ) -> jnp.ndarray:
    """output: (N, D); bank: (SIZE, D) row-major. Returns (N,) int32 argmax of
    the cosine-similarity matrix (first-index tie-break)."""
    n, d = output.shape
    size, d2 = bank.shape
    assert d == d2 and size > 0

    if compute_dtype is None:
        compute_dtype = (bank.dtype
                         if bank.dtype in (jnp.dtype(jnp.bfloat16),
                                           jnp.dtype(jnp.float32))
                         else jnp.float32)

    # --- query normalization: once, in f32, then cast to compute dtype ------
    q32 = output.astype(jnp.float32)
    qinv = jax.lax.rsqrt(jnp.maximum(jnp.sum(q32 * q32, axis=1, keepdims=True),
                                     1e-24))
    xn = (q32 * qinv).astype(compute_dtype)

    # --- bank inverse row norms (precomputed if the caller maintains them) --
    if inv_norm is None:
        b32 = bank.astype(jnp.float32)
        inv_norm = jax.lax.rsqrt(jnp.maximum(jnp.sum(b32 * b32, axis=1), 1e-24))
    inv_norm = inv_norm.astype(jnp.float32).reshape(size)

    # --- tiling derived from the actual device VMEM -------------------------
    vmem_cap = _vmem_capacity_bytes()
    budget = int(vmem_cap * 0.55)          # leave headroom for compiler scratch

    bank_item = jnp.dtype(bank.dtype).itemsize
    q_item = jnp.dtype(compute_dtype).itemsize

    # bank slab sized by bytes (multiple of 128 rows), capped by budget
    slab_bytes = max(d * bank_item * 128, min(max_slab_bytes, budget // 4))
    tile_k = max(128, (slab_bytes // (d * bank_item)) // 128 * 128)
    tile_k = min(tile_k, _round_up(size, 128))

    # per-query-row VMEM: sim(f32) + iota(i32) + masked copy + query block
    per_row = 3 * tile_k * 4 + 2 * d * q_item + 64
    rem = budget - 2 * tile_k * d * bank_item - 4 * tile_k * 4
    tile_n = max(8, (max(rem, 0) // per_row) // 8 * 8)
    if max_query_rows is not None:
        tile_n = min(tile_n, max(8, _round_up(int(max_query_rows), 8)))
    tile_n = min(tile_n, _round_up(n, 8))
    n_pad = _round_up(n, tile_n)

    # bank shards (one per TensorCore at most) and padding
    if num_bank_shards is None:
        num_bank_shards = _default_num_bank_shards()
    real_slabs = _cdiv(size, tile_k)
    n_shards = max(1, min(int(num_bank_shards), real_slabs))
    spp = _cdiv(real_slabs, n_shards)              # slabs per shard
    size_pad = n_shards * spp * tile_k

    # --- pad inputs ----------------------------------------------------------
    if n_pad != n:
        xn = jnp.pad(xn, ((0, n_pad - n), (0, 0)))
    bank_p = bank if size_pad == size else jnp.pad(bank,
                                                   ((0, size_pad - size), (0, 0)))
    inv_p = inv_norm if size_pad == size else jnp.pad(inv_norm,
                                                      ((0, size_pad - size),))
    col = jnp.arange(size_pad, dtype=jnp.int32)
    bias = jnp.where(col < size, 0.0, -1e30).astype(jnp.float32)
    aux = jnp.stack([inv_p, bias], axis=0)          # (2, size_pad) f32

    grid = (n_shards, n_pad // tile_n, spp)
    cols_per_shard = spp * tile_k

    kernel = functools.partial(_nn_argmax_kernel,
                               compute_dtype=compute_dtype,
                               cols_per_shard=cols_per_shard)

    vals, idxs = pl.pallas_call(
        kernel,
        out_shape=(jax.ShapeDtypeStruct((n_shards, n_pad, 1), jnp.float32),
                   jax.ShapeDtypeStruct((n_shards, n_pad, 1), jnp.int32)),
        grid_spec=pltpu.PrefetchScalarGridSpec(
            num_scalar_prefetch=0,
            grid=grid,
            in_specs=[
                pl.BlockSpec((tile_n, d), lambda s, i, k: (i, 0)),          # queries
                pl.BlockSpec((tile_k, d), lambda s, i, k: (s * spp + k, 0)),  # bank slab
                pl.BlockSpec((2, tile_k), lambda s, i, k: (0, s * spp + k)),  # inv-norm/bias
            ],
            out_specs=[
                pl.BlockSpec((1, tile_n, 1), lambda s, i, k: (s, i, 0)),
                pl.BlockSpec((1, tile_n, 1), lambda s, i, k: (s, i, 0)),
            ],
            scratch_shapes=[
                pltpu.VMEM((tile_n, 1), jnp.float32),   # running max similarity
                pltpu.VMEM((tile_n, 1), jnp.int32),     # running best index
            ],
        ),
        compiler_params=pltpu.CompilerParams(
            dimension_semantics=("parallel", "parallel", "arbitrary"),
            vmem_limit_bytes=int(vmem_cap * 0.9)),
    )(xn, bank_p, aux)

    # --- merge per-shard partial results (trivial XLA ops) -------------------
    vals = vals[..., 0]                             # (S, N_pad)
    idxs = idxs[..., 0]                             # (S, N_pad)
    best = jnp.max(vals, axis=0, keepdims=True)
    idx = jnp.min(jnp.where(vals == best, idxs, jnp.int32(size_pad)), axis=0)
    return idx[:n]


def nearest_neighbours_pallas(output: jnp.ndarray,
                              bank: jnp.ndarray,
                              inv_norm: jnp.ndarray | None = None,
                              **kwargs) -> jnp.ndarray:
    """Returns the (un-renormalized) nearest bank rows for each query row."""
    idx = nearest_neighbour_indices_pallas(output, bank, inv_norm, **kwargs)
    return jnp.take(bank, idx, axis=0)


# --------------------------------------------------------------------------- #
# module
# --------------------------------------------------------------------------- #
class NNMemoryBank:
    """Functional JAX port of NNMemoryBankModule (hot path in Pallas).

    The bank is kept row-major (SIZE, D) — the transpose of the torch buffer —
    which is semantically identical and avoids a full-bank transpose per call.
    A (SIZE,) inverse-norm vector is maintained incrementally so the kernel
    never renormalizes bank slabs.
    """

    def __init__(self, size: int, dim: int, key: jax.Array,
                 dtype=jnp.bfloat16, compute_dtype=None):
        if size <= 0:
            raise ValueError(f"Memory bank size must be positive, got {size}.")
        self.size = size
        self.dim = dim
        self.compute_dtype = compute_dtype
        # torch: randn(dim, size), normalized per bank entry -> here (size, dim)
        bank = jax.random.normal(key, (size, dim), dtype=jnp.float32)
        binv = jax.lax.rsqrt(jnp.maximum(jnp.sum(bank * bank, axis=1,
                                                 keepdims=True), 1e-24))
        self.bank = (bank * binv).astype(dtype)                 # (size, dim)
        b32 = self.bank.astype(jnp.float32)
        self.inv_norm = jax.lax.rsqrt(jnp.maximum(jnp.sum(b32 * b32, axis=1),
                                                  1e-24))       # (size,)
        self.bank_ptr = 0

    def _dequeue_and_enqueue(self, batch: jnp.ndarray) -> None:
        # plain-JAX glue (not the hot path); mirrors the torch ring-buffer.
        batch = batch.astype(jnp.float32)
        batch_size = batch.shape[0]
        ptr = self.bank_ptr
        if ptr + batch_size >= self.size:
            rows = batch[: self.size - ptr]
            new_ptr = 0
        else:
            rows = batch
            new_ptr = ptr + batch_size
        rows_stored = rows.astype(self.bank.dtype)
        r32 = rows_stored.astype(jnp.float32)
        inv = jax.lax.rsqrt(jnp.maximum(jnp.sum(r32 * r32, axis=1), 1e-24))
        self.bank = jax.lax.dynamic_update_slice(self.bank, rows_stored, (ptr, 0))
        self.inv_norm = jax.lax.dynamic_update_slice(self.inv_norm, inv, (ptr,))
        self.bank_ptr = new_ptr

    def __call__(self, output: jnp.ndarray, update: bool = False) -> jnp.ndarray:
        bank_snapshot = self.bank            # clone().detach() equivalent
        inv_snapshot = self.inv_norm
        if update:
            self._dequeue_and_enqueue(output)
        idx = nearest_neighbour_indices_pallas(output, bank_snapshot,
                                               inv_norm=inv_snapshot,
                                               compute_dtype=self.compute_dtype)
        return jnp.take(bank_snapshot, idx, axis=0)


# --------------------------------------------------------------------------- #
# reference + test
# --------------------------------------------------------------------------- #
def _reference(output: jnp.ndarray, bank: jnp.ndarray) -> jnp.ndarray:
    """Pure-JAX port of the torch forward (bank given as (SIZE, D))."""
    out32 = output.astype(jnp.float32)
    b32 = bank.astype(jnp.float32)
    out_n = out32 / jnp.maximum(jnp.linalg.norm(out32, axis=1, keepdims=True), 1e-12)
    bank_n = b32 / jnp.maximum(jnp.linalg.norm(b32, axis=1, keepdims=True), 1e-12)
    sim = out_n @ bank_n.T
    idx = jnp.argmax(sim, axis=1)
    return bank[idx]


if __name__ == "__main__":
    key = jax.random.PRNGKey(0)
    k_bank, k_out = jax.random.split(key)

    # --- main check: f32 bank/compute, bit-exact argmax vs reference --------
    N, D, SIZE = 8, 32, 512
    module = NNMemoryBank(size=SIZE, dim=D, key=k_bank,
                          dtype=jnp.float32, compute_dtype=jnp.float32)
    output = jax.random.normal(k_out, (N, D), dtype=jnp.float32)

    bank_snapshot = module.bank              # snapshot used by this forward
    nn = module(output, update=True)         # forward pass (also enqueues batch)
    nn = jax.block_until_ready(nn)

    ref = _reference(output, bank_snapshot)
    assert nn.shape == (N, D)
    assert bool(jnp.allclose(nn, ref.astype(nn.dtype), atol=1e-5)), \
        "mismatch vs reference"

    # --- second check: exercises padding + multi-slab + bank-shard merge ----
    k_b2, k_o2 = jax.random.split(jax.random.PRNGKey(1))
    N2, D2, SIZE2 = 16, 32, 300              # 300 is not a slab multiple
    bank2 = jax.random.normal(k_b2, (SIZE2, D2), dtype=jnp.float32)
    out2 = jax.random.normal(k_o2, (N2, D2), dtype=jnp.float32)
    idx2 = nearest_neighbour_indices_pallas(
        out2, bank2, compute_dtype=jnp.float32,
        max_slab_bytes=128 * D2 * 4,          # force 128-row slabs -> 3 real slabs
        num_bank_shards=2)                    # 2-way bank-axis shard + merge
    idx2 = jax.block_until_ready(idx2)
    o2n = out2 / jnp.linalg.norm(out2, axis=1, keepdims=True)
    b2n = bank2 / jnp.linalg.norm(bank2, axis=1, keepdims=True)
    ref_idx2 = jnp.argmax(o2n @ b2n.T, axis=1).astype(idx2.dtype)
    assert bool(jnp.array_equal(idx2, ref_idx2)), "shard/pad path mismatch"

    # --- third check: default bf16 storage/compute path runs cleanly --------
    module_bf16 = NNMemoryBank(size=SIZE, dim=D, key=k_bank)   # bf16 default
    nn_bf16 = jax.block_until_ready(module_bf16(output))
    assert nn_bf16.shape == (N, D)
    assert bool(jnp.all(jnp.isfinite(nn_bf16.astype(jnp.float32))))

    print("KERNEL_OK")
</pallas_src>

<mosaic_0001>
module attributes {stable_mosaic.version = 11 : i64} {
  func.func @_nn_argmax_kernel(%arg0: i32, %arg1: i32, %arg2: i32, %arg3: memref<8x32xf32, #tpu.memory_space<vmem>>, %arg4: memref<512x32xf32, #tpu.memory_space<vmem>>, %arg5: memref<2x512xf32, #tpu.memory_space<vmem>>, %arg6: memref<1x8x1xf32, #tpu.memory_space<vmem>>, %arg7: memref<1x8x1xi32, #tpu.memory_space<vmem>>, %arg8: memref<8x1xf32, #tpu.memory_space<vmem>>, %arg9: memref<8x1xi32, #tpu.memory_space<vmem>>) attributes {dimension_semantics = [#tpu.dimension_semantics<parallel>, #tpu.dimension_semantics<parallel>, #tpu.dimension_semantics<arbitrary>], iteration_bounds = array<i64: 1, 1, 1>, scalar_prefetch = 0 : i64, scratch_operands = 2 : i64, tpu.core_type = #tpu.core_type<tc>, window_params = [{transform_indices = @transform_0, window_bounds = array<i64: 8, 32>}, {transform_indices = @transform_1, window_bounds = array<i64: 512, 32>}, {transform_indices = @transform_2, window_bounds = array<i64: 2, 512>}, {transform_indices = @transform_3, window_bounds = array<i64: 1, 8, 1>}, {transform_indices = @transform_4, window_bounds = array<i64: 1, 8, 1>}]} {
    %c0_i32 = arith.constant 0 : i32
    %0 = arith.cmpi eq, %arg2, %c0_i32 : i32
    %1 = arith.extui %0 : i1 to i32
    %c0_i32_0 = arith.constant 0 : i32
    %2 = arith.cmpi ne, %1, %c0_i32_0 : i32
    scf.if %2 {
      %cst_23 = arith.constant 0xFF800000 : f32
      %37 = vector.broadcast %cst_23 : f32 to vector<8x1xf32>
      %c0_24 = arith.constant 0 : index
      %c0_25 = arith.constant 0 : index
      %38 = vector.load %arg8[%c0_24, %c0_25] : memref<8x1xf32, #tpu.memory_space<vmem>>, vector<8x1xf32>
      tpu.vector_store %arg8[%c0_24, %c0_25], %37 {strides = array<i32>} : memref<8x1xf32, #tpu.memory_space<vmem>>, vector<8x1xf32>,
      %c0_i32_26 = arith.constant 0 : i32
      %39 = vector.broadcast %c0_i32_26 : i32 to vector<8x1xi32>
      %c0_27 = arith.constant 0 : index
      %c0_28 = arith.constant 0 : index
      %40 = vector.load %arg9[%c0_27, %c0_28] : memref<8x1xi32, #tpu.memory_space<vmem>>, vector<8x1xi32>
      tpu.vector_store %arg9[%c0_27, %c0_28], %39 {strides = array<i32>} : memref<8x1xi32, #tpu.memory_space<vmem>>, vector<8x1xi32>,
    } else {
    }
    %c0 = arith.constant 0 : index
    %c0_1 = arith.constant 0 : index
    %3 = vector.load %arg3[%c0, %c0_1] : memref<8x32xf32, #tpu.memory_space<vmem>>, vector<8x32xf32>
    %c0_2 = arith.constant 0 : index
    %c0_3 = arith.constant 0 : index
    %4 = vector.load %arg4[%c0_2, %c0_3] : memref<512x32xf32, #tpu.memory_space<vmem>>, vector<512x32xf32>
    %cst = arith.constant dense<0.000000e+00> : vector<8x512xf32>
    %5 = tpu.matmul %3, %4, %cst {dimension_numbers = #tpu.dot_dimension_numbers<[1], [1], [0], [0], [0, 0, 1, 0], [], []>} : vector<8x32xf32>, vector<512x32xf32>, vector<8x512xf32> -> vector<8x512xf32>
    %c0_4 = arith.constant 0 : index
    %c0_5 = arith.constant 0 : index
    %6 = vector.load %arg5[%c0_4, %c0_5] : memref<2x512xf32, #tpu.memory_space<vmem>>, vector<1x512xf32>
    %c1 = arith.constant 1 : index
    %c0_6 = arith.constant 0 : index
    %7 = vector.load %arg5[%c1, %c0_6] : memref<2x512xf32, #tpu.memory_space<vmem>>, vector<1x512xf32>
    %8 = vector.broadcast %6 : vector<1x512xf32> to vector<8x512xf32>
    %9 = arith.mulf %5, %8 : vector<8x512xf32>
    %10 = vector.broadcast %7 : vector<1x512xf32> to vector<8x512xf32>
    %11 = arith.addf %9, %10 : vector<8x512xf32>
    %cst_7 = arith.constant dense<0xFF800000> : vector<8xf32>
    %12 = vector.multi_reduction <maximumf>, %11, %cst_7 [1] : vector<8x512xf32> to vector<8xf32>
    %13 = vector.shape_cast %12 : vector<8xf32> to vector<8x1xf32>
    %14 = tpu.iota {dimensions = array<i32: 1>} : vector<8x512xi32>
    %15 = vector.broadcast %13 : vector<8x1xf32> to vector<8x512xf32>
    %16 = arith.cmpf oge, %11, %15 : vector<8x512xf32>
    %c512_i32 = arith.constant 512 : i32
    %17 = vector.broadcast %c512_i32 : i32 to vector<8x512xi32>
    %18 = arith.select %16, %14, %17 : vector<8x512xi1>, vector<8x512xi32>
    %cst_8 = arith.constant dense<2147483647> : vector<8xi32>
    %19 = vector.multi_reduction <minsi>, %18, %cst_8 [1] : vector<8x512xi32> to vector<8xi32>
    %20 = vector.shape_cast %19 : vector<8xi32> to vector<8x1xi32>
    %c512_i32_9 = arith.constant 512 : i32
    %21 = arith.muli %arg0, %c512_i32_9 : i32
    %c512_i32_10 = arith.constant 512 : i32
    %22 = arith.muli %arg2, %c512_i32_10 : i32
    %23 = arith.addi %21, %22 : i32
    %24 = vector.broadcast %23 : i32 to vector<8x1xi32>
    %25 = arith.addi %20, %24 : vector<8x1xi32>
    %c0_11 = arith.constant 0 : index
    %c0_12 = arith.constant 0 : index
    %26 = vector.load %arg8[%c0_11, %c0_12] : memref<8x1xf32, #tpu.memory_space<vmem>>, vector<8x1xf32>
    %27 = arith.cmpf ogt, %13, %26 : vector<8x1xf32>
    %c0_13 = arith.constant 0 : index
    %c0_14 = arith.constant 0 : index
    %28 = vector.load %arg8[%c0_13, %c0_14] : memref<8x1xf32, #tpu.memory_space<vmem>>, vector<8x1xf32>
    %29 = arith.select %27, %13, %28 : vector<8x1xi1>, vector<8x1xf32>
    %c0_15 = arith.constant 0 : index
    %c0_16 = arith.constant 0 : index
    %30 = vector.load %arg8[%c0_15, %c0_16] : memref<8x1xf32, #tpu.memory_space<vmem>>, vector<8x1xf32>
    tpu.vector_store %arg8[%c0_15, %c0_16], %29 {strides = array<i32>} : memref<8x1xf32, #tpu.memory_space<vmem>>, vector<8x1xf32>,
    %c0_17 = arith.constant 0 : index
    %c0_18 = arith.constant 0 : index
    %31 = vector.load %arg9[%c0_17, %c0_18] : memref<8x1xi32, #tpu.memory_space<vmem>>, vector<8x1xi32>
    %32 = arith.select %27, %25, %31 : vector<8x1xi1>, vector<8x1xi32>
    %c0_19 = arith.constant 0 : index
    %c0_20 = arith.constant 0 : index
    %33 = vector.load %arg9[%c0_19, %c0_20] : memref<8x1xi32, #tpu.memory_space<vmem>>, vector<8x1xi32>
    tpu.vector_store %arg9[%c0_19, %c0_20], %32 {strides = array<i32>} : memref<8x1xi32, #tpu.memory_space<vmem>>, vector<8x1xi32>,
    %c0_i32_21 = arith.constant 0 : i32
    %34 = arith.cmpi eq, %arg2, %c0_i32_21 : i32
    %35 = arith.extui %34 : i1 to i32
    %c0_i32_22 = arith.constant 0 : i32
    %36 = arith.cmpi ne, %35, %c0_i32_22 : i32
    scf.if %36 {
      %c0_23 = arith.constant 0 : index
      %c0_24 = arith.constant 0 : index
      %37 = vector.load %arg8[%c0_23, %c0_24] : memref<8x1xf32, #tpu.memory_space<vmem>>, vector<8x1xf32>
      %38 = vector.shape_cast %37 : vector<8x1xf32> to vector<1x8x1xf32>
      %c0_25 = arith.constant 0 : index
      %c0_26 = arith.constant 0 : index
      %c0_27 = arith.constant 0 : index
      %39 = vector.load %arg6[%c0_25, %c0_26, %c0_27] : memref<1x8x1xf32, #tpu.memory_space<vmem>>, vector<1x8x1xf32>
      tpu.vector_store %arg6[%c0_25, %c0_26, %c0_27], %38 {strides = array<i32>} : memref<1x8x1xf32, #tpu.memory_space<vmem>>, vector<1x8x1xf32>,
      %c0_28 = arith.constant 0 : index
      %c0_29 = arith.constant 0 : index
      %40 = vector.load %arg9[%c0_28, %c0_29] : memref<8x1xi32, #tpu.memory_space<vmem>>, vector<8x1xi32>
      %41 = vector.shape_cast %40 : vector<8x1xi32> to vector<1x8x1xi32>
      %c0_30 = arith.constant 0 : index
      %c0_31 = arith.constant 0 : index
      %c0_32 = arith.constant 0 : index
      %42 = vector.load %arg7[%c0_30, %c0_31, %c0_32] : memref<1x8x1xi32, #tpu.memory_space<vmem>>, vector<1x8x1xi32>
      tpu.vector_store %arg7[%c0_30, %c0_31, %c0_32], %41 {strides = array<i32>} : memref<1x8x1xi32, #tpu.memory_space<vmem>>, vector<1x8x1xi32>,
    } else {
    }
    return
  }
  func.func @transform_0(%arg0: i32, %arg1: i32, %arg2: i32) -> (i32, i32) {
    %c0_i32 = arith.constant 0 : i32
    %c0_i32_0 = arith.constant 0 : i32
    return %arg1, %c0_i32 : i32, i32
  }
  func.func @transform_1(%arg0: i32, %arg1: i32, %arg2: i32) -> (i32, i32) {
    %c1_i32 = arith.constant 1 : i32
    %0 = arith.muli %arg0, %c1_i32 : i32
    %1 = arith.addi %0, %arg2 : i32
    %c0_i32 = arith.constant 0 : i32
    %c0_i32_0 = arith.constant 0 : i32
    return %1, %c0_i32 : i32, i32
  }
  func.func @transform_2(%arg0: i32, %arg1: i32, %arg2: i32) -> (i32, i32) {
    %c1_i32 = arith.constant 1 : i32
    %0 = arith.muli %arg0, %c1_i32 : i32
    %1 = arith.addi %0, %arg2 : i32
    %c0_i32 = arith.constant 0 : i32
    %c0_i32_0 = arith.constant 0 : i32
    return %c0_i32, %1 : i32, i32
  }
  func.func @transform_3(%arg0: i32, %arg1: i32, %arg2: i32) -> (i32, i32, i32) {
    %c0_i32 = arith.constant 0 : i32
    %c0_i32_0 = arith.constant 0 : i32
    return %arg0, %arg1, %c0_i32 : i32, i32, i32
  }
  func.func @transform_4(%arg0: i32, %arg1: i32, %arg2: i32) -> (i32, i32, i32) {
    %c0_i32 = arith.constant 0 : i32
    %c0_i32_0 = arith.constant 0 : i32
    return %arg0, %arg1, %c0_i32 : i32, i32, i32
  }
}

</mosaic_0001>

<llo_original>
// kernel: tpu_custom_call.1
$region0: #{tpu_custom_call.1}
  #allocation0 [shape = 'u32[]', space=smem, size = 0x4, offset = 0x4, fixed_abs, tag = 'smem constant byte address 0x4 - core index']
  #allocation1 [shape = 'u32[144,128]{1,0:T(1,128)}', space=vmem, size = 0x12000, scoped, tag = 'internal scratch']
  #allocation2 [shape = 'f32[8,1]{1,0:T(8,128)}', space=vmem, size = 0x1000, scoped, tag = 'scratch operand']
  #allocation3 [shape = 's32[8,1]{1,0:T(8,128)}', space=vmem, size = 0x1000, scoped, tag = 'scratch operand']
  %s0 = inlined_call_operand.vmem [shape: f32[8,32], index: 0, kind: input, shape index: {}]
  %s1 = inlined_call_operand.vmem [shape: f32[512,32], index: 1, kind: input, shape index: {}]
  %s2 = inlined_call_operand.vmem [shape: f32[2,512], index: 2, kind: input, shape index: {}]
  %s3 = inlined_call_operand.vmem [shape: f32[1,8,1], index: 3, kind: output, shape index: {0}]
  %s4 = inlined_call_operand.vmem [shape: s32[1,8,1], index: 4, kind: output, shape index: {1}]
  %5 = xla_tuple %s3, %s4
  %s6 = sld [smem:[#allocation0]]
  $region38: #{tpu_custom_call.1} parent=0
    _
  %s8 = ssub.s32 1, %s6
  %s9 = scalar_select 0, %s8, %s6
  // Predicated region
  $region2: #{tpu_custom_call.1} parent=0 // pred_check
    _
  $region3: #{tpu_custom_call.1} parent=0 // pred_check_branch
    %11 = sbr.rel (0) target = $region5
  $region4: #{tpu_custom_call.1} parent=0 // pred_region
    _
  $region5: #{tpu_custom_call.1} parent=0 // pred_fallthru
    _
  // Predicated region
  $region6: #{tpu_custom_call.1} parent=0 // pred_check
    _
  $region7: #{tpu_custom_call.1} parent=0 // pred_check_branch
    %13 = sbr.rel (0) target = $region9
  $region8: #{tpu_custom_call.1} parent=0 // pred_region
    %s14 = sadd.s32 0, 0
    %s15 = smul.u32 64, %s14
    %p16 = scmp.lt.s32.totalorder %s15, 63
    %s17 = scalar_select %p16, %s15, 63
    %s18 = smul.addr %s17, 8
    %s19 = scalar_lea.vmem %s1, %s18
    %s20 = sadd.s32 0, 0
    %s21 = smul.u32 64, %s20
  $region9: #{tpu_custom_call.1} parent=0 // pred_fallthru
    _
  // Predicated region
  $region10: #{tpu_custom_call.1} parent=0 // pred_check
    _
  $region11: #{tpu_custom_call.1} parent=0 // pred_check_branch
    %23 = sbr.rel (0) target = $region13
  $region12: #{tpu_custom_call.1} parent=0 // pred_region
    %s24 = sadd.s32 0, 0
    %s25 = smul.u32 4, %s24
    %p26 = scmp.lt.s32.totalorder %s25, 3
    %s27 = scalar_select %p26, %s25, 3
    %s28 = smul.addr %s27, 2
    %s29 = scalar_lea.vmem %s2, %s28
    %s30 = sadd.s32 0, 0
    %s31 = smul.u32 4, %s30
  $region13: #{tpu_custom_call.1} parent=0 // pred_fallthru
    _
  %s32 = sadd.s32 0, 0
  %s33 = smul.u32 64, %s32
  %p34 = scmp.lt.s32.totalorder %s33, 63
  %s35 = scalar_select %p34, %s33, 63
  %s36 = smul.addr %s35, 8
  %s37 = scalar_lea.vmem %s1, %s36
  %s38 = sadd.s32 0, 0
  %s39 = smul.u32 4, %s38
  %p40 = scmp.lt.s32.totalorder %s39, 3
  %s41 = scalar_select %p40, %s39, 3
  %s42 = smul.addr %s41, 2
  %s43 = scalar_lea.vmem %s2, %s42
  %s44 = sadd.s32 0, 0
  %s45 = smul.u32 64, %s44
  %p46 = scmp.lt.s32.totalorder %s45, 63
  %s47 = scalar_select %p46, %s45, 63
  %s48 = smul.addr %s47, 8
  %s49 = scalar_lea.vmem %s1, %s48
  %s50 = sadd.s32 0, 0
  %s51 = smul.u32 64, %s50
  %s52 = sadd.s32 0, 0
  %s53 = smul.u32 4, %s52
  %p54 = scmp.lt.s32.totalorder %s53, 3
  %s55 = scalar_select %p54, %s53, 3
  %s56 = smul.addr %s55, 2
  %s57 = scalar_lea.vmem %s2, %s56
  %s58 = sadd.s32 0, 0
  %s59 = smul.u32 4, %s58
  %p60 = scmp.eq.s32.totalorder 0, 0
  // Predicated region
  $region14: #{tpu_custom_call.1} parent=0 // pred_check
    %p61 = pneg %p60
  $region15: #{tpu_custom_call.1} parent=0 // pred_check_branch
    %63 = sbr.rel (%p61) target = $region17
  $region16: #{tpu_custom_call.1} parent=0 // pred_region
    %vm64 = vcmask 7168
    %65 = vst.msk [vmem:[#allocation2] sm:$0xff] %vm64, -inf
    %66 = vst.msk [vmem:[#allocation3] sm:$0xff] %vm64, 0
  $region17: #{tpu_custom_call.1} parent=0 // pred_fallthru
    _
  %v67 = vld [vmem:[%s0] sm:$0xff]
  %v68 = vld [vmem:[%s49] sm:$0xff]
  %v69 = vld [vmem:[%s49 + $0x8] sm:$0xff]
  %v70 = vld [vmem:[%s49 + $0x10] sm:$0xff]
  %v71 = vld [vmem:[%s49 + $0x18] sm:$0xff]
  %v72 = vld [vmem:[%s49 + $0x20] sm:$0xff]
  %v73 = vld [vmem:[%s49 + $0x28] sm:$0xff]
  %v74 = vld [vmem:[%s49 + $0x30] sm:$0xff]
  %v75 = vld [vmem:[%s49 + $0x38] sm:$0xff]
  %v76 = vld [vmem:[%s49 + $0x40] sm:$0xff]
  %v77 = vld [vmem:[%s49 + $0x48] sm:$0xff]
  %v78 = vld [vmem:[%s49 + $0x50] sm:$0xff]
  %v79 = vld [vmem:[%s49 + $0x58] sm:$0xff]
  %v80 = vld [vmem:[%s49 + $0x60] sm:$0xff]
  %v81 = vld [vmem:[%s49 + $0x68] sm:$0xff]
  %v82 = vld [vmem:[%s49 + $0x70] sm:$0xff]
  %v83 = vld [vmem:[%s49 + $0x78] sm:$0xff]
  %v84 = vld [vmem:[%s49 + $0x80] sm:$0xff]
  %v85 = vld [vmem:[%s49 + $0x88] sm:$0xff]
  %v86 = vld [vmem:[%s49 + $0x90] sm:$0xff]
  %v87 = vld [vmem:[%s49 + $0x98] sm:$0xff]
  %v88 = vld [vmem:[%s49 + $0xa0] sm:$0xff]
  %v89 = vld [vmem:[%s49 + $0xa8] sm:$0xff]
  %v90 = vld [vmem:[%s49 + $0xb0] sm:$0xff]
  %v91 = vld [vmem:[%s49 + $0xb8] sm:$0xff]
  %v92 = vld [vmem:[%s49 + $0xc0] sm:$0xff]
  %v93 = vld [vmem:[%s49 + $0xc8] sm:$0xff]
  %v94 = vld [vmem:[%s49 + $0xd0] sm:$0xff]
  %v95 = vld [vmem:[%s49 + $0xd8] sm:$0xff]
  %v96 = vld [vmem:[%s49 + $0xe0] sm:$0xff]
  %v97 = vld [vmem:[%s49 + $0xe8] sm:$0xff]
  %v98 = vld [vmem:[%s49 + $0xf0] sm:$0xff]
  %v99 = vld [vmem:[%s49 + $0xf8] sm:$0xff]
  %v100 = vld [vmem:[%s49 + $0x100] sm:$0xff]
  %v101 = vld [vmem:[%s49 + $0x108] sm:$0xff]
  %v102 = vld [vmem:[%s49 + $0x110] sm:$0xff]
  %v103 = vld [vmem:[%s49 + $0x118] sm:$0xff]
  %v104 = vld [vmem:[%s49 + $0x120] sm:$0xff]
  %v105 = vld [vmem:[%s49 + $0x128] sm:$0xff]
  %v106 = vld [vmem:[%s49 + $0x130] sm:$0xff]
  %v107 = vld [vmem:[%s49 + $0x138] sm:$0xff]
  %v108 = vld [vmem:[%s49 + $0x140] sm:$0xff]
  %v109 = vld [vmem:[%s49 + $0x148] sm:$0xff]
  %v110 = vld [vmem:[%s49 + $0x150] sm:$0xff]
  %v111 = vld [vmem:[%s49 + $0x158] sm:$0xff]
  %v112 = vld [vmem:[%s49 + $0x160] sm:$0xff]
  %v113 = vld [vmem:[%s49 + $0x168] sm:$0xff]
  %v114 = vld [vmem:[%s49 + $0x170] sm:$0xff]
  %v115 = vld [vmem:[%s49 + $0x178] sm:$0xff]
  %v116 = vld [vmem:[%s49 + $0x180] sm:$0xff]
  %v117 = vld [vmem:[%s49 + $0x188] sm:$0xff]
  %v118 = vld [vmem:[%s49 + $0x190] sm:$0xff]
  %v119 = vld [vmem:[%s49 + $0x198] sm:$0xff]
  %v120 = vld [vmem:[%s49 + $0x1a0] sm:$0xff]
  %v121 = vld [vmem:[%s49 + $0x1a8] sm:$0xff]
  %v122 = vld [vmem:[%s49 + $0x1b0] sm:$0xff]
  %v123 = vld [vmem:[%s49 + $0x1b8] sm:$0xff]
  %v124 = vld [vmem:[%s49 + $0x1c0] sm:$0xff]
  %v125 = vld [vmem:[%s49 + $0x1c8] sm:$0xff]
  %v126 = vld [vmem:[%s49 + $0x1d0] sm:$0xff]
  %v127 = vld [vmem:[%s49 + $0x1d8] sm:$0xff]
  %v128 = vld [vmem:[%s49 + $0x1e0] sm:$0xff]
  %v129 = vld [vmem:[%s49 + $0x1e8] sm:$0xff]
  %v130 = vld [vmem:[%s49 + $0x1f0] sm:$0xff]
  %v131 = vld [vmem:[%s49 + $0x1f8] sm:$0xff]
  %vm132 = vcmask 261120
  %v134 = vsel %vm132, %v67, 0
  %v137 = vsel %vm132, %v68, 0
  %v140 = vsel %vm132, %v69, 0
  %v143 = vsel %vm132, %v70, 0
  %v146 = vsel %vm132, %v71, 0
  %v149 = vsel %vm132, %v72, 0
  %v152 = vsel %vm132, %v73, 0
  %v155 = vsel %vm132, %v74, 0
  %v158 = vsel %vm132, %v75, 0
  %v161 = vsel %vm132, %v76, 0
  %v164 = vsel %vm132, %v77, 0
  %v167 = vsel %vm132, %v78, 0
  %v170 = vsel %vm132, %v79, 0
  %v173 = vsel %vm132, %v80, 0
  %v176 = vsel %vm132, %v81, 0
  %v179 = vsel %vm132, %v82, 0
  %v182 = vsel %vm132, %v83, 0
  %v185 = vsel %vm132, %v84, 0
  %v188 = vsel %vm132, %v85, 0
  %v191 = vsel %vm132, %v86, 0
  %v194 = vsel %vm132, %v87, 0
  %v197 = vsel %vm132, %v88, 0
  %v200 = vsel %vm132, %v89, 0
  %v203 = vsel %vm132, %v90, 0
  %v206 = vsel %vm132, %v91, 0
  %v209 = vsel %vm132, %v92, 0
  %v212 = vsel %vm132, %v93, 0
  %v215 = vsel %vm132, %v94, 0
  %v218 = vsel %vm132, %v95, 0
  %v221 = vsel %vm132, %v96, 0
  %v224 = vsel %vm132, %v97, 0
  %v227 = vsel %vm132, %v98, 0
  %v230 = vsel %vm132, %v99, 0
  %v233 = vsel %vm132, %v100, 0
  %v236 = vsel %vm132, %v101, 0
  %v239 = vsel %vm132, %v102, 0
  %v242 = vsel %vm132, %v103, 0
  %v245 = vsel %vm132, %v104, 0
  %v248 = vsel %vm132, %v105, 0
  %v251 = vsel %vm132, %v106, 0
  %v254 = vsel %vm132, %v107, 0
  %v257 = vsel %vm132, %v108, 0
  %v260 = vsel %vm132, %v109, 0
  %v263 = vsel %vm132, %v110, 0
  %v266 = vsel %vm132, %v111, 0
  %v269 = vsel %vm132, %v112, 0
  %v272 = vsel %vm132, %v113, 0
  %v275 = vsel %vm132, %v114, 0
  %v278 = vsel %vm132, %v115, 0
  %v281 = vsel %vm132, %v116, 0
  %v284 = vsel %vm132, %v117, 0
  %v287 = vsel %vm132, %v118, 0
  %v290 = vsel %vm132, %v119, 0
  %v293 = vsel %vm132, %v120, 0
  %v296 = vsel %vm132, %v121, 0
  %v299 = vsel %vm132, %v122, 0
  %v302 = vsel %vm132, %v123, 0
  %v305 = vsel %vm132, %v124, 0
  %v308 = vsel %vm132, %v125, 0
  %v311 = vsel %vm132, %v126, 0
  %v314 = vsel %vm132, %v127, 0
  %v317 = vsel %vm132, %v128, 0
  %v320 = vsel %vm132, %v129, 0
  %v323 = vsel %vm132, %v130, 0
  %v326 = vsel %vm132, %v131, 0
  %328 = vmatprep.subr.mxu0 0.0
  %329 = vmatpush1.xpose.msra.mxu0 %v137
  %330 = vmatprep.subr.mxu0 0.0
  %331 = vmatpush1.xpose.msra.mxu0 %v140
  %332 = vmatprep.subr.mxu0 0.0
  %333 = vmatpush1.xpose.msra.mxu0 %v143
  %334 = vmatprep.subr.mxu0 0.0
  %335 = vmatpush1.xpose.msra.mxu0 %v146
  %336 = vmatprep.subr.mxu0 0.0
  %337 = vmatpush1.xpose.msra.mxu0 %v149
  %338 = vmatprep.subr.mxu0 0.0
  %339 = vmatpush1.xpose.msra.mxu0 %v152
  %340 = vmatprep.subr.mxu0 0.0
  %341 = vmatpush1.xpose.msra.mxu0 %v155
  %342 = vmatprep.subr.mxu0 0.0
  %343 = vmatpush1.xpose.msra.mxu0 %v158
  %344 = vmatprep.subr.mxu0 0.0
  %345 = vmatpush1.xpose.msra.mxu0 %v161
  %346 = vmatprep.subr.mxu0 0.0
  %347 = vmatpush1.xpose.msra.mxu0 %v164
  %348 = vmatprep.subr.mxu0 0.0
  %349 = vmatpush1.xpose.msra.mxu0 %v167
  %350 = vmatprep.subr.mxu0 0.0
  %351 = vmatpush1.xpose.msra.mxu0 %v170
  %352 = vmatprep.subr.mxu0 0.0
  %353 = vmatpush1.xpose.msra.mxu0 %v173
  %354 = vmatprep.subr.mxu0 0.0
  %355 = vmatpush1.xpose.msra.mxu0 %v176
  %356 = vmatprep.subr.mxu0 0.0
  %357 = vmatpush1.xpose.msra.mxu0 %v179
  %358 = vmatprep.subr.mxu0 0.0
  %359 = vmatpush1.xpose.msra.mxu0 %v182
  %360 = vmatprep.subr.mxu0 0.0
  %361 = vmatpush1.xpose.msra.mxu0 %v185
  %362 = vmatprep.subr.mxu0 0.0
  %363 = vmatpush1.xpose.msra.mxu0 %v188
  %364 = vmatprep.subr.mxu0 0.0
  %365 = vmatpush1.xpose.msra.mxu0 %v191
  %366 = vmatprep.subr.mxu0 0.0
  %367 = vmatpush1.xpose.msra.mxu0 %v194
  %368 = vmatprep.subr.mxu0 0.0
  %369 = vmatpush1.xpose.msra.mxu0 %v197
  %370 = vmatprep.subr.mxu0 0.0
  %371 = vmatpush1.xpose.msra.mxu0 %v200
  %372 = vmatprep.subr.mxu0 0.0
  %373 = vmatpush1.xpose.msra.mxu0 %v203
  %374 = vmatprep.subr.mxu0 0.0
  %375 = vmatpush1.xpose.msra.mxu0 %v206
  %376 = vmatprep.subr.mxu0 0.0
  %377 = vmatpush1.xpose.msra.mxu0 %v209
  %378 = vmatprep.subr.mxu0 0.0
  %379 = vmatpush1.xpose.msra.mxu0 %v212
  %380 = vmatprep.subr.mxu0 0.0
  %381 = vmatpush1.xpose.msra.mxu0 %v215
  %382 = vmatprep.subr.mxu0 0.0
  %383 = vmatpush1.xpose.msra.mxu0 %v218
  %384 = vmatprep.subr.mxu0 0.0
  %385 = vmatpush1.xpose.msra.mxu0 %v221
  %386 = vmatprep.subr.mxu0 0.0
  %387 = vmatpush1.xpose.msra.mxu0 %v224
  %388 = vmatprep.subr.mxu0 0.0
  %389 = vmatpush1.xpose.msra.mxu0 %v227
  %390 = vmatprep.subr.mxu0 0.0
  %391 = vmatpush1.xpose.msra.mxu0 %v230
  %392 = vmatprep.mubr.f32.mxu0 0.0
  %393 = vmatmul.mubr.f32.gmra.mrb[0].mxu0 %v134
  %v394 = vpop.f32.mrb[0].mxu0
  %v395 = vadd.f32 0.0, %v394
  %v396 = vpop.f32.mrb[0].mxu0
  %v397 = vadd.f32 0.0, %v396
  %398 = vdwg.mxu0
  %399 = vmatprep.subr.mxu0 0.0
  %400 = vmatpush1.xpose.msra.mxu0 %v233
  %401 = vmatprep.subr.mxu0 0.0
  %402 = vmatpush1.xpose.msra.mxu0 %v236
  %403 = vmatprep.subr.mxu0 0.0
  %404 = vmatpush1.xpose.msra.mxu0 %v239
  %405 = vmatprep.subr.mxu0 0.0
  %406 = vmatpush1.xpose.msra.mxu0 %v242
  %407 = vmatprep.subr.mxu0 0.0
  %408 = vmatpush1.xpose.msra.mxu0 %v245
  %409 = vmatprep.subr.mxu0 0.0
  %410 = vmatpush1.xpose.msra.mxu0 %v248
  %411 = vmatprep.subr.mxu0 0.0
  %412 = vmatpush1.xpose.msra.mxu0 %v251
  %413 = vmatprep.subr.mxu0 0.0
  %414 = vmatpush1.xpose.msra.mxu0 %v254
  %415 = vmatprep.subr.mxu0 0.0
  %416 = vmatpush1.xpose.msra.mxu0 %v257
  %417 = vmatprep.subr.mxu0 0.0
  %418 = vmatpush1.xpose.msra.mxu0 %v260
  %419 = vmatprep.subr.mxu0 0.0
  %420 = vmatpush1.xpose.msra.mxu0 %v263
  %421 = vmatprep.subr.mxu0 0.0
  %422 = vmatpush1.xpose.msra.mxu0 %v266
  %423 = vmatprep.subr.mxu0 0.0
  %424 = vmatpush1.xpose.msra.mxu0 %v269
  %425 = vmatprep.subr.mxu0 0.0
  %426 = vmatpush1.xpose.msra.mxu0 %v272
  %427 = vmatprep.subr.mxu0 0.0
  %428 = vmatpush1.xpose.msra.mxu0 %v275
  %429 = vmatprep.subr.mxu0 0.0
  %430 = vmatpush1.xpose.msra.mxu0 %v278
  %431 = vmatprep.subr.mxu0 0.0
  %432 = vmatpush1.xpose.msra.mxu0 %v281
  %433 = vmatprep.subr.mxu0 0.0
  %434 = vmatpush1.xpose.msra.mxu0 %v284
  %435 = vmatprep.subr.mxu0 0.0
  %436 = vmatpush1.xpose.msra.mxu0 %v287
  %437 = vmatprep.subr.mxu0 0.0
  %438 = vmatpush1.xpose.msra.mxu0 %v290
  %439 = vmatprep.subr.mxu0 0.0
  %440 = vmatpush1.xpose.msra.mxu0 %v293
  %441 = vmatprep.subr.mxu0 0.0
  %442 = vmatpush1.xpose.msra.mxu0 %v296
  %443 = vmatprep.subr.mxu0 0.0
  %444 = vmatpush1.xpose.msra.mxu0 %v299
  %445 = vmatprep.subr.mxu0 0.0
  %446 = vmatpush1.xpose.msra.mxu0 %v302
  %447 = vmatprep.subr.mxu0 0.0
  %448 = vmatpush1.xpose.msra.mxu0 %v305
  %449 = vmatprep.subr.mxu0 0.0
  %450 = vmatpush1.xpose.msra.mxu0 %v308
  %451 = vmatprep.subr.mxu0 0.0
  %452 = vmatpush1.xpose.msra.mxu0 %v311
  %453 = vmatprep.subr.mxu0 0.0
  %454 = vmatpush1.xpose.msra.mxu0 %v314
  %455 = vmatprep.subr.mxu0 0.0
  %456 = vmatpush1.xpose.msra.mxu0 %v317
  %457 = vmatprep.subr.mxu0 0.0
  %458 = vmatpush1.xpose.msra.mxu0 %v320
  %459 = vmatprep.subr.mxu0 0.0
  %460 = vmatpush1.xpose.msra.mxu0 %v323
  %461 = vmatprep.subr.mxu0 0.0
  %462 = vmatpush1.xpose.msra.mxu0 %v326
  %463 = vmatprep.mubr.f32.mxu0 0.0
  %464 = vmatmul.mubr.f32.gmra.mrb[0].mxu0 %v134
  %v465 = vpop.f32.mrb[0].mxu0
  %v466 = vadd.f32 0.0, %v465
  %v467 = vpop.f32.mrb[0].mxu0
  %v468 = vadd.f32 0.0, %v467
  %469 = vdwg.mxu0
  %v470 = vld [vmem:[%s57] ss:$2 sm:$0xf]
  %s471 = scalar_lea.vmem %s57, 1
  %v472 = vld [vmem:[%s471] ss:$2 sm:$0xf]
  %v474 = vlaneseq
  %v475 = vshrl.u32 %v474, 7
  %v476 = vsub.s32 0, %v475
  %v477 = vrot.slane %v470, %v476
  %v478 = vlaneseq
  %v479 = vshrl.u32 %v478, 7
  %v480 = vsub.s32 1, %v479
  %v481 = vrot.slane %v470, %v480
  %v482 = vlaneseq
  %v483 = vshrl.u32 %v482, 7
  %v484 = vsub.s32 2, %v483
  %v485 = vrot.slane %v470, %v484
  %v486 = vlaneseq
  %v487 = vshrl.u32 %v486, 7
  %v488 = vsub.s32 3, %v487
  %v489 = vrot.slane %v470, %v488
  %v494 = vmul.f32 %v395, %v477
  %v495 = vmul.f32 %v397, %v481
  %v496 = vmul.f32 %v466, %v485
  %v497 = vmul.f32 %v468, %v489
  %v499 = vlaneseq
  %v500 = vshrl.u32 %v499, 7
  %v501 = vsub.s32 0, %v500
  %v502 = vrot.slane %v472, %v501
  %v503 = vlaneseq
  %v504 = vshrl.u32 %v503, 7
  %v505 = vsub.s32 1, %v504
  %v506 = vrot.slane %v472, %v505
  %v507 = vlaneseq
  %v508 = vshrl.u32 %v507, 7
  %v509 = vsub.s32 2, %v508
  %v510 = vrot.slane %v472, %v509
  %v511 = vlaneseq
  %v512 = vshrl.u32 %v511, 7
  %v513 = vsub.s32 3, %v512
  %v514 = vrot.slane %v472, %v513
  %v519 = vadd.f32 %v494, %v502
  %v520 = vadd.f32 %v495, %v506
  %v521 = vadd.f32 %v496, %v510
  %v522 = vadd.f32 %v497, %v514
  %v523 = vmax.f32 %v519, %v520
  %v524 = vmax.f32 %v521, %v522
  %v525 = vmax.f32 %v523, %v524
  %526 = vmax.xlane.f32.xlu0 %v525
  %v527 = vpop.xlane.xlu0 %526
  %v528 = vlaneseq
  %v529 = vand.u32 %v528, 127
  %v530 = vadd.s32 %v529, 128
  %v531 = vadd.s32 %v529, 256
  %v532 = vadd.s32 %v529, 384
  %vm533 = vcmp.ge.f32.partialorder %v519, %v527
  %vm534 = vcmp.ge.f32.partialorder %v520, %v527
  %vm535 = vcmp.ge.f32.partialorder %v521, %v527
  %vm536 = vcmp.ge.f32.partialorder %v522, %v527
  %v537 = vsel %vm533, %v529, 512
  %v538 = vsel %vm534, %v530, 512
  %v539 = vsel %vm535, %v531, 512
  %v540 = vsel %vm536, %v532, 512
  %vm541 = vcmp.lt.s32.totalorder %v537, %v538
  %v542 = vsel %vm541, %v537, %v538
  %vm543 = vcmp.lt.s32.totalorder %v539, %v540
  %v544 = vsel %vm543, %v539, %v540
  %vm545 = vcmp.lt.s32.totalorder %v542, %v544
  %v546 = vsel %vm545, %v542, %v544
  %v547 = vand.u32 %v546, 65535
  %v548 = vshra.s32 %v546, 16
  %v549 = vcvt.s32.f32 %v547
  %v550 = vcvt.s32.f32 %v548
  %551 = vmin.xlane.f32.xlu0 %v550
  %v552 = vpop.xlane.xlu0 %551
  %vm553 = vcmp.eq.f32.partialorder %v550, %v552
  %v554 = vsel %vm553, %v549, inf
  %555 = vmin.xlane.f32.xlu0 %v554
  %v556 = vpop.xlane.xlu0 %555
  %v557 = vcvt.f32.s32 %v556
  %v558 = vcvt.f32.s32 %v552
  %v559 = vshll.u32 %v558, 16
  %v560 = vadd.s32 %v559, %v557
  %s561 = smul.u32 0, 512
  %s562 = smul.u32 0, 512
  %s563 = sadd.s32 %s561, %s562
  %v564 = vstv %s563
  %v565 = vadd.s32 %v560, %v564
  %v566 = vld [vmem:[#allocation2] sm:$0xff]
  %vm567 = vcmp.gt.f32.partialorder %v527, %v566
  %v568 = vsel %vm567, %v527, %v566
  %vm569 = vcmask 7168
  %570 = vst.msk [vmem:[#allocation2] sm:$0xff] %vm569, %v568
  %v571 = vld [vmem:[#allocation3] sm:$0xff]
  %v572 = vsel %vm567, %v565, %v571
  %573 = vst.msk [vmem:[#allocation3] sm:$0xff] %vm569, %v572
  // Predicated region
  $region18: #{tpu_custom_call.1} parent=0 // pred_check
    %p574 = pneg %p60
  $region19: #{tpu_custom_call.1} parent=0 // pred_check_branch
    %576 = sbr.rel (%p574) target = $region21
  $region20: #{tpu_custom_call.1} parent=0 // pred_region
    %v577 = vld [vmem:[#allocation2] sm:$0xff]
    %578 = vst.msk [vmem:[%s3] sm:$0xff] %vm569, %v577
    %v579 = vld [vmem:[#allocation3] sm:$0xff]
    %580 = vst.msk [vmem:[%s4] sm:$0xff] %vm569, %v579
  $region21: #{tpu_custom_call.1} parent=0 // pred_fallthru
    _
  // Predicated region
  $region22: #{tpu_custom_call.1} parent=0 // pred_check
    _
  $region23: #{tpu_custom_call.1} parent=0 // pred_check_branch
    %582 = sbr.rel (0) target = $region25
  $region24: #{tpu_custom_call.1} parent=0 // pred_region
    _
  $region25: #{tpu_custom_call.1} parent=0 // pred_fallthru
    _
  // Predicated region
  $region26: #{tpu_custom_call.1} parent=0 // pred_check
    _
  $region27: #{tpu_custom_call.1} parent=0 // pred_check_branch
    %584 = sbr.rel (0) target = $region29
  $region28: #{tpu_custom_call.1} parent=0 // pred_region
    _
  $region29: #{tpu_custom_call.1} parent=0 // pred_fallthru
    _
  // Predicated region
  $region30: #{tpu_custom_call.1} parent=0 // pred_check
    _
  $region31: #{tpu_custom_call.1} parent=0 // pred_check_branch
    %586 = sbr.rel (0) target = $region33
  $region32: #{tpu_custom_call.1} parent=0 // pred_region
    _
  $region33: #{tpu_custom_call.1} parent=0 // pred_fallthru
    _
  // Predicated region
  $region34: #{tpu_custom_call.1} parent=0 // pred_check
    _
  $region35: #{tpu_custom_call.1} parent=0 // pred_check_branch
    %588 = sbr.rel (0) target = $region37
  $region36: #{tpu_custom_call.1} parent=0 // pred_region
    _
  $region37: #{tpu_custom_call.1} parent=0 // pred_fallthru
    _

</llo_original>
